<compile_context>
chip_gen: v5e
topology: v5e:2x2
jax: 0.10.0
libtpu: 0.0.40
codegen_flags: <defaults>
</compile_context>

<pallas_src>
import functools

import jax
import jax.numpy as jnp
from jax.experimental import pallas as pl
from jax.experimental.pallas import tpu as pltpu

C1 = 0.01 ** 2
C2 = 0.03 ** 2

# Rough peak VMEM bytes per (block_rows * block_width) element for one grid
# step: double-buffered f32 in/out blocks plus the live f32 intermediates of
# the fused SSIM math (~14 slabs).
_SLAB_FACTOR = 80


def _vmem_capacity_bytes():
    try:
        return int(pltpu.get_tpu_info().vmem_capacity_bytes)
    except Exception:  # non-TPU / older jax: assume the smallest (v7x, 64 MiB)
        return 64 * 1024 * 1024


def _vmem_limit_bytes(step_bytes, vmem_cap):
    cap = (3 * vmem_cap) // 4           # never request more than 3/4 physical
    return int(min(cap, max(32 * 1024 * 1024, 2 * step_bytes)))


def _ssim_math(x, y):
    """SSIM loss on one reflection-padded 2-D slab.

    x, y: (Hc + 2, Wq) float32.  Returns (Hc, Wq - 2); output column j uses
    padded columns j, j+1, j+2, so for lane-packed planes the valid columns
    of plane b are [b * Wp, b * Wp + W).
    """
    hc = x.shape[0] - 2
    wo = x.shape[1] - 2

    # Row slices (vertical 3-tap window).  Second moments are summed directly
    # from these slices; full xx / yy / xy slabs are never materialized.
    x0, x1, x2 = x[0:hc, :], x[1:hc + 1, :], x[2:hc + 2, :]
    y0, y1, y2 = y[0:hc, :], y[1:hc + 1, :], y[2:hc + 2, :]

    vx = x0 + x1 + x2
    vy = y0 + y1 + y2
    vxx = x0 * x0 + x1 * x1 + x2 * x2
    vyy = y0 * y0 + y1 * y1 + y2 * y2
    vxy = x0 * y0 + x1 * y1 + x2 * y2

    def hsum3(a):                        # horizontal (lane) 3-tap window
        return a[:, 0:wo] + a[:, 1:wo + 1] + a[:, 2:wo + 2]

    sx, sy = hsum3(vx), hsum3(vy)
    sxx, syy, sxy = hsum3(vxx), hsum3(vyy), hsum3(vxy)

    # 3x3 average-pool normalization (1/9) folded into the constants: both
    # SSIM_n and SSIM_d are scaled by 81**2, which cancels in the ratio.
    c1 = jnp.float32(81.0 * C1)
    c2 = jnp.float32(81.0 * C2)
    sxsy = sx * sy
    sx2 = sx * sx
    sy2 = sy * sy
    n = (2.0 * sxsy + c1) * (2.0 * (9.0 * sxy - sxsy) + c2)
    d = (sx2 + sy2 + c1) * (9.0 * (sxx + syy) - sx2 - sy2 + c2)

    # Divide via EUP approx reciprocal + one Newton-Raphson step (~1e-7 rel).
    r = pl.reciprocal(d, approx=True)
    r = r * (2.0 - d * r)
    return jnp.clip((1.0 - n * r) * 0.5, 0.0, 1.0)


def _ssim_block_kernel(xp_ref, yp_ref, o_ref):
    x = xp_ref[0].astype(jnp.float32)
    y = yp_ref[0].astype(jnp.float32)
    o_ref[0] = _ssim_math(x, y).astype(o_ref.dtype)


def _ssim_strip_kernel(x_hbm, y_hbm, o_ref, xbuf, ybuf, sem):
    """Manual double-buffered row-strip pipeline over HBM-resident planes."""
    p = pl.program_id(0)
    t = pl.program_id(1)
    nt = pl.num_programs(1)
    th = o_ref.shape[1]                  # output rows per strip (multiple of 8)
    rows = xbuf.shape[1]                 # th + 2 (2-row halo)

    def start_fetch(strip, slot):
        r0 = strip * th
        pltpu.make_async_copy(x_hbm.at[p, pl.ds(r0, rows), :],
                              xbuf.at[slot], sem.at[0, slot]).start()
        pltpu.make_async_copy(y_hbm.at[p, pl.ds(r0, rows), :],
                              ybuf.at[slot], sem.at[1, slot]).start()

    # Prime this plane's first strip.  Per-plane priming keeps the t-loop
    # self-contained, so the plane axis can be split across TensorCores.
    @pl.when(t == 0)
    def _():
        start_fetch(0, 0)

    slot = t & 1
    pltpu.make_async_copy(x_hbm.at[p, pl.ds(0, rows), :],
                          xbuf.at[slot], sem.at[0, slot]).wait()
    pltpu.make_async_copy(y_hbm.at[p, pl.ds(0, rows), :],
                          ybuf.at[slot], sem.at[1, slot]).wait()

    @pl.when(t + 1 < nt)
    def _():
        start_fetch(t + 1, 1 - slot)

    x = xbuf[slot].astype(jnp.float32)
    y = ybuf[slot].astype(jnp.float32)
    o_ref[0] = _ssim_math(x, y).astype(o_ref.dtype)


def _ssim_planes(xp, yp, H, W, vmem_cap):
    """Wide planes: one plane per grid step, exact-width output, no packing."""
    P, Hp, Wp = xp.shape
    step_bytes = _SLAB_FACTOR * Hp * Wp
    return pl.pallas_call(
        _ssim_block_kernel,
        out_shape=jax.ShapeDtypeStruct((P, H, W), xp.dtype),
        grid_spec=pltpu.PrefetchScalarGridSpec(
            num_scalar_prefetch=0,
            grid=(P,),
            in_specs=[pl.BlockSpec((1, Hp, Wp), lambda p: (p, 0, 0)),
                      pl.BlockSpec((1, Hp, Wp), lambda p: (p, 0, 0))],
            out_specs=pl.BlockSpec((1, H, W), lambda p: (p, 0, 0)),
        ),
        compiler_params=pltpu.CompilerParams(
            dimension_semantics=("parallel",),
            vmem_limit_bytes=_vmem_limit_bytes(step_bytes, vmem_cap),
        ),
    )(xp, yp)


def _choose_packing(P, Hp, Wp, budget):
    """How many planes to pack along the lane dimension per grid step."""
    by_budget = max(1, budget // (_SLAB_FACTOR * Hp * Wp))
    B = max(1, min(P, by_budget, 128))
    # Keep >= 2 grid steps (v7x has 2 TensorCores, and a 1-step grid cannot
    # overlap DMA with compute) unless that drops below two lane tiles.
    half = -(-P // 2)
    if P >= 2 and half * Wp >= 256:
        B = min(B, half)
    return B


def _ssim_packed(xp, yp, H, W, vmem_cap):
    """Narrow planes: pack B planes side by side along the lane dimension."""
    P, Hp, Wp = xp.shape
    budget = vmem_cap // 2
    B = _choose_packing(P, Hp, Wp, budget)
    G = -(-P // B)
    Ppad = G * B
    if Ppad != P:
        # Zero-filled extra planes are benign (denominator stays > 0) and are
        # sliced away below.
        xp = jnp.pad(xp, ((0, Ppad - P), (0, 0), (0, 0)))
        yp = jnp.pad(yp, ((0, Ppad - P), (0, 0), (0, 0)))
    L = B * Wp

    # Wrapper-side layout plumbing; fuses with the reflection pad in XLA.
    xg = xp.reshape(G, B, Hp, Wp).transpose(0, 2, 1, 3).reshape(G, Hp, L)
    yg = yp.reshape(G, B, Hp, Wp).transpose(0, 2, 1, 3).reshape(G, Hp, L)

    step_bytes = _SLAB_FACTOR * Hp * L
    out = pl.pallas_call(
        _ssim_block_kernel,
        out_shape=jax.ShapeDtypeStruct((G, H, L - 2), xp.dtype),
        grid_spec=pltpu.PrefetchScalarGridSpec(
            num_scalar_prefetch=0,
            grid=(G,),
            in_specs=[pl.BlockSpec((1, Hp, L), lambda g: (g, 0, 0)),
                      pl.BlockSpec((1, Hp, L), lambda g: (g, 0, 0))],
            out_specs=pl.BlockSpec((1, H, L - 2), lambda g: (g, 0, 0)),
        ),
        compiler_params=pltpu.CompilerParams(
            dimension_semantics=("parallel",),
            vmem_limit_bytes=_vmem_limit_bytes(step_bytes, vmem_cap),
        ),
    )(xg, yg)

    # Unpack with a single stack-of-slices pass (valid columns of packed
    # plane b are [b*Wp, b*Wp + W)); no full-output re-pad pass.
    parts = [out[:, :, b * Wp: b * Wp + W] for b in range(B)]
    out = jnp.stack(parts, axis=1).reshape(Ppad, H, W)
    return out[:P]


def _ssim_strips(xp, yp, H, W, vmem_cap, max_rows_per_block):
    """Big planes: H-tiled row strips with a 2-row halo, manual DMA pipeline."""
    P, Hp, Wp = xp.shape
    budget = vmem_cap // 2

    th_max = budget // (_SLAB_FACTOR * Wp) - 2
    if max_rows_per_block is not None:
        th_max = min(th_max, int(max_rows_per_block))
    th_max = max(8, th_max)
    T = -(-H // th_max)                  # number of row strips
    th = -(-H // (8 * T)) * 8            # strip height: multiple of 8 sublanes
    Ho = T * th

    # Pad rows so every strip's (th + 2)-row input window is in bounds; the
    # extra zero rows only feed output rows >= H, which are sliced away.
    extra = (Ho + 2) - Hp
    if extra > 0:
        xp = jnp.pad(xp, ((0, 0), (0, extra), (0, 0)))
        yp = jnp.pad(yp, ((0, 0), (0, extra), (0, 0)))

    rows = th + 2
    step_bytes = _SLAB_FACTOR * rows * Wp
    out = pl.pallas_call(
        _ssim_strip_kernel,
        out_shape=jax.ShapeDtypeStruct((P, Ho, W), xp.dtype),
        grid_spec=pltpu.PrefetchScalarGridSpec(
            num_scalar_prefetch=0,
            grid=(P, T),
            in_specs=[pl.BlockSpec(memory_space=pl.ANY),
                      pl.BlockSpec(memory_space=pl.ANY)],
            out_specs=pl.BlockSpec((1, th, W), lambda p, t: (p, t, 0)),
            scratch_shapes=[
                pltpu.VMEM((2, rows, Wp), xp.dtype),
                pltpu.VMEM((2, rows, Wp), yp.dtype),
                pltpu.SemaphoreType.DMA((2, 2)),
            ],
        ),
        compiler_params=pltpu.CompilerParams(
            dimension_semantics=("parallel", "arbitrary"),
            vmem_limit_bytes=_vmem_limit_bytes(step_bytes, vmem_cap),
        ),
    )(xp, yp)
    if Ho != H:
        out = out[:, :H, :]
    return out


@functools.partial(jax.jit, static_argnames=("max_rows_per_block",))
def ssim(x, y, *, max_rows_per_block=None):
    """SSIM loss matching the PyTorch SSIM module's forward pass.

    Args:
      x, y: float arrays of shape (N, C, H, W).
      max_rows_per_block: optional static cap on output rows per grid step;
        forces the H-tiled (manual-DMA) path.
    Returns:
      Array of shape (N, C, H, W), same dtype as x.
    """
    assert x.shape == y.shape and x.ndim == 4
    N, C, H, W = x.shape
    Hp, Wp = H + 2, W + 2
    P = N * C

    vmem_cap = _vmem_capacity_bytes()
    budget = vmem_cap // 2

    # ReflectionPad2d(1): plain-JAX glue (fuses into the input copy).
    pad = ((0, 0), (0, 0), (1, 1), (1, 1))
    xp = jnp.pad(x, pad, mode="reflect").reshape(P, Hp, Wp)
    yp = jnp.pad(y, pad, mode="reflect").reshape(P, Hp, Wp)

    whole_plane_bytes = _SLAB_FACTOR * Hp * Wp
    if max_rows_per_block is not None or whole_plane_bytes > budget:
        out = _ssim_strips(xp, yp, H, W, vmem_cap, max_rows_per_block)
    elif Wp >= 512:
        out = _ssim_planes(xp, yp, H, W, vmem_cap)
    else:
        out = _ssim_packed(xp, yp, H, W, vmem_cap)
    return out.reshape(N, C, H, W)


def _ssim_ref(x, y):
    """Pure-JAX reference mirroring the PyTorch module."""
    pad = ((0, 0), (0, 0), (1, 1), (1, 1))
    xp = jnp.pad(x, pad, mode="reflect")
    yp = jnp.pad(y, pad, mode="reflect")

    def avgpool3(a):
        N, C_, Hp, Wp = a.shape
        H, W = Hp - 2, Wp - 2
        s = jnp.zeros((N, C_, H, W), jnp.float32)
        for di in range(3):
            for dj in range(3):
                s = s + a[:, :, di:di + H, dj:dj + W]
        return s / 9.0

    mu_x = avgpool3(xp)
    mu_y = avgpool3(yp)
    sigma_x = avgpool3(xp * xp) - mu_x ** 2
    sigma_y = avgpool3(yp * yp) - mu_y ** 2
    sigma_xy = avgpool3(xp * yp) - mu_x * mu_y
    n = (2 * mu_x * mu_y + C1) * (2 * sigma_xy + C2)
    d = (mu_x ** 2 + mu_y ** 2 + C1) * (sigma_x + sigma_y + C2)
    return jnp.clip((1 - n / d) / 2, 0.0, 1.0)


if __name__ == "__main__":
    key = jax.random.PRNGKey(0)
    kx, ky = jax.random.split(key)

    # 1) Narrow planes -> lane-packed path.
    N, C, H, W = 2, 4, 16, 16
    x = jax.random.uniform(kx, (N, C, H, W), dtype=jnp.float32)
    y = jax.random.uniform(ky, (N, C, H, W), dtype=jnp.float32)
    out = jax.block_until_ready(ssim(x, y))
    ref = jax.block_until_ready(_ssim_ref(x, y))
    assert out.shape == (N, C, H, W)
    assert jnp.allclose(out, ref, atol=1e-5, rtol=1e-5)

    # 2) H-tiled manual-DMA strip path (forced at a small shape).
    out_t = jax.block_until_ready(ssim(x, y, max_rows_per_block=8))
    assert jnp.allclose(out_t, ref, atol=1e-5, rtol=1e-5)

    # 3) Wide planes -> direct (unpacked) path.
    N2, Cc, H2, W2 = 1, 2, 16, 510
    x2 = jax.random.uniform(kx, (N2, Cc, H2, W2), dtype=jnp.float32)
    y2 = jax.random.uniform(ky, (N2, Cc, H2, W2), dtype=jnp.float32)
    out2 = jax.block_until_ready(ssim(x2, y2))
    ref2 = jax.block_until_ready(_ssim_ref(x2, y2))
    assert out2.shape == (N2, Cc, H2, W2)
    assert jnp.allclose(out2, ref2, atol=1e-5, rtol=1e-5)

    print("KERNEL_OK")
</pallas_src>

<mosaic_0001>
module attributes {stable_mosaic.version = 11 : i64} {
  func.func @_ssim_block_kernel(%arg0: i32, %arg1: memref<1x18x144xf32, #tpu.memory_space<vmem>>, %arg2: memref<1x18x144xf32, #tpu.memory_space<vmem>>, %arg3: memref<1x16x142xf32, #tpu.memory_space<vmem>>) attributes {dimension_semantics = [#tpu.dimension_semantics<parallel>], iteration_bounds = array<i64: 1>, scalar_prefetch = 0 : i64, scratch_operands = 0 : i64, tpu.core_type = #tpu.core_type<tc>, window_params = [{transform_indices = @transform_0, window_bounds = array<i64: 1, 18, 144>}, {transform_indices = @transform_1, window_bounds = array<i64: 1, 18, 144>}, {transform_indices = @transform_2, window_bounds = array<i64: 1, 16, 142>}]} {
    %c0 = arith.constant 0 : index
    %c0_0 = arith.constant 0 : index
    %c0_1 = arith.constant 0 : index
    %0 = vector.load %arg1[%c0, %c0_0, %c0_1] : memref<1x18x144xf32, #tpu.memory_space<vmem>>, vector<1x18x144xf32>
    %1 = vector.shape_cast %0 : vector<1x18x144xf32> to vector<18x144xf32>
    %c0_2 = arith.constant 0 : index
    %c0_3 = arith.constant 0 : index
    %c0_4 = arith.constant 0 : index
    %2 = vector.load %arg2[%c0_2, %c0_3, %c0_4] : memref<1x18x144xf32, #tpu.memory_space<vmem>>, vector<1x18x144xf32>
    %3 = vector.shape_cast %2 : vector<1x18x144xf32> to vector<18x144xf32>
    %4 = vector.extract_strided_slice %1 {offsets = [0, 0], sizes = [16, 144], strides = [1, 1]} : vector<18x144xf32> to vector<16x144xf32>
    %5 = vector.extract_strided_slice %1 {offsets = [1, 0], sizes = [16, 144], strides = [1, 1]} : vector<18x144xf32> to vector<16x144xf32>
    %6 = vector.extract_strided_slice %1 {offsets = [2, 0], sizes = [16, 144], strides = [1, 1]} : vector<18x144xf32> to vector<16x144xf32>
    %7 = vector.extract_strided_slice %3 {offsets = [0, 0], sizes = [16, 144], strides = [1, 1]} : vector<18x144xf32> to vector<16x144xf32>
    %8 = vector.extract_strided_slice %3 {offsets = [1, 0], sizes = [16, 144], strides = [1, 1]} : vector<18x144xf32> to vector<16x144xf32>
    %9 = vector.extract_strided_slice %3 {offsets = [2, 0], sizes = [16, 144], strides = [1, 1]} : vector<18x144xf32> to vector<16x144xf32>
    %10 = arith.addf %4, %5 : vector<16x144xf32>
    %11 = arith.addf %10, %6 : vector<16x144xf32>
    %12 = arith.addf %7, %8 : vector<16x144xf32>
    %13 = arith.addf %12, %9 : vector<16x144xf32>
    %14 = arith.mulf %4, %4 : vector<16x144xf32>
    %15 = arith.mulf %5, %5 : vector<16x144xf32>
    %16 = arith.addf %14, %15 : vector<16x144xf32>
    %17 = arith.mulf %6, %6 : vector<16x144xf32>
    %18 = arith.addf %16, %17 : vector<16x144xf32>
    %19 = arith.mulf %7, %7 : vector<16x144xf32>
    %20 = arith.mulf %8, %8 : vector<16x144xf32>
    %21 = arith.addf %19, %20 : vector<16x144xf32>
    %22 = arith.mulf %9, %9 : vector<16x144xf32>
    %23 = arith.addf %21, %22 : vector<16x144xf32>
    %24 = arith.mulf %4, %7 : vector<16x144xf32>
    %25 = arith.mulf %5, %8 : vector<16x144xf32>
    %26 = arith.addf %24, %25 : vector<16x144xf32>
    %27 = arith.mulf %6, %9 : vector<16x144xf32>
    %28 = arith.addf %26, %27 : vector<16x144xf32>
    %29 = vector.extract_strided_slice %11 {offsets = [0, 0], sizes = [16, 142], strides = [1, 1]} : vector<16x144xf32> to vector<16x142xf32>
    %30 = vector.extract_strided_slice %11 {offsets = [0, 1], sizes = [16, 142], strides = [1, 1]} : vector<16x144xf32> to vector<16x142xf32>
    %31 = arith.addf %29, %30 : vector<16x142xf32>
    %32 = vector.extract_strided_slice %11 {offsets = [0, 2], sizes = [16, 142], strides = [1, 1]} : vector<16x144xf32> to vector<16x142xf32>
    %33 = arith.addf %31, %32 : vector<16x142xf32>
    %34 = vector.extract_strided_slice %13 {offsets = [0, 0], sizes = [16, 142], strides = [1, 1]} : vector<16x144xf32> to vector<16x142xf32>
    %35 = vector.extract_strided_slice %13 {offsets = [0, 1], sizes = [16, 142], strides = [1, 1]} : vector<16x144xf32> to vector<16x142xf32>
    %36 = arith.addf %34, %35 : vector<16x142xf32>
    %37 = vector.extract_strided_slice %13 {offsets = [0, 2], sizes = [16, 142], strides = [1, 1]} : vector<16x144xf32> to vector<16x142xf32>
    %38 = arith.addf %36, %37 : vector<16x142xf32>
    %39 = vector.extract_strided_slice %18 {offsets = [0, 0], sizes = [16, 142], strides = [1, 1]} : vector<16x144xf32> to vector<16x142xf32>
    %40 = vector.extract_strided_slice %18 {offsets = [0, 1], sizes = [16, 142], strides = [1, 1]} : vector<16x144xf32> to vector<16x142xf32>
    %41 = arith.addf %39, %40 : vector<16x142xf32>
    %42 = vector.extract_strided_slice %18 {offsets = [0, 2], sizes = [16, 142], strides = [1, 1]} : vector<16x144xf32> to vector<16x142xf32>
    %43 = arith.addf %41, %42 : vector<16x142xf32>
    %44 = vector.extract_strided_slice %23 {offsets = [0, 0], sizes = [16, 142], strides = [1, 1]} : vector<16x144xf32> to vector<16x142xf32>
    %45 = vector.extract_strided_slice %23 {offsets = [0, 1], sizes = [16, 142], strides = [1, 1]} : vector<16x144xf32> to vector<16x142xf32>
    %46 = arith.addf %44, %45 : vector<16x142xf32>
    %47 = vector.extract_strided_slice %23 {offsets = [0, 2], sizes = [16, 142], strides = [1, 1]} : vector<16x144xf32> to vector<16x142xf32>
    %48 = arith.addf %46, %47 : vector<16x142xf32>
    %49 = vector.extract_strided_slice %28 {offsets = [0, 0], sizes = [16, 142], strides = [1, 1]} : vector<16x144xf32> to vector<16x142xf32>
    %50 = vector.extract_strided_slice %28 {offsets = [0, 1], sizes = [16, 142], strides = [1, 1]} : vector<16x144xf32> to vector<16x142xf32>
    %51 = arith.addf %49, %50 : vector<16x142xf32>
    %52 = vector.extract_strided_slice %28 {offsets = [0, 2], sizes = [16, 142], strides = [1, 1]} : vector<16x144xf32> to vector<16x142xf32>
    %53 = arith.addf %51, %52 : vector<16x142xf32>
    %54 = arith.mulf %33, %38 : vector<16x142xf32>
    %55 = arith.mulf %33, %33 : vector<16x142xf32>
    %56 = arith.mulf %38, %38 : vector<16x142xf32>
    %cst = arith.constant 2.000000e+00 : f32
    %57 = vector.broadcast %cst : f32 to vector<16x142xf32>
    %58 = arith.mulf %57, %54 : vector<16x142xf32>
    %cst_5 = arith.constant 8.100000e-03 : f32
    %59 = vector.broadcast %cst_5 : f32 to vector<16x142xf32>
    %60 = arith.addf %58, %59 : vector<16x142xf32>
    %cst_6 = arith.constant 9.000000e+00 : f32
    %61 = vector.broadcast %cst_6 : f32 to vector<16x142xf32>
    %62 = arith.mulf %61, %53 : vector<16x142xf32>
    %63 = arith.subf %62, %54 : vector<16x142xf32>
    %cst_7 = arith.constant 2.000000e+00 : f32
    %64 = vector.broadcast %cst_7 : f32 to vector<16x142xf32>
    %65 = arith.mulf %64, %63 : vector<16x142xf32>
    %cst_8 = arith.constant 7.290000e-02 : f32
    %66 = vector.broadcast %cst_8 : f32 to vector<16x142xf32>
    %67 = arith.addf %65, %66 : vector<16x142xf32>
    %68 = arith.mulf %60, %67 : vector<16x142xf32>
    %69 = arith.addf %55, %56 : vector<16x142xf32>
    %cst_9 = arith.constant 8.100000e-03 : f32
    %70 = vector.broadcast %cst_9 : f32 to vector<16x142xf32>
    %71 = arith.addf %69, %70 : vector<16x142xf32>
    %72 = arith.addf %43, %48 : vector<16x142xf32>
    %cst_10 = arith.constant 9.000000e+00 : f32
    %73 = vector.broadcast %cst_10 : f32 to vector<16x142xf32>
    %74 = arith.mulf %73, %72 : vector<16x142xf32>
    %75 = arith.subf %74, %55 : vector<16x142xf32>
    %76 = arith.subf %75, %56 : vector<16x142xf32>
    %cst_11 = arith.constant 7.290000e-02 : f32
    %77 = vector.broadcast %cst_11 : f32 to vector<16x142xf32>
    %78 = arith.addf %76, %77 : vector<16x142xf32>
    %79 = arith.mulf %71, %78 : vector<16x142xf32>
    %80 = tpu.reciprocal %79 {approx = true} : vector<16x142xf32> -> vector<16x142xf32>
    %81 = arith.mulf %79, %80 : vector<16x142xf32>
    %cst_12 = arith.constant 2.000000e+00 : f32
    %82 = vector.broadcast %cst_12 : f32 to vector<16x142xf32>
    %83 = arith.subf %82, %81 : vector<16x142xf32>
    %84 = arith.mulf %80, %83 : vector<16x142xf32>
    %85 = arith.mulf %68, %84 : vector<16x142xf32>
    %cst_13 = arith.constant 1.000000e+00 : f32
    %86 = vector.broadcast %cst_13 : f32 to vector<16x142xf32>
    %87 = arith.subf %86, %85 : vector<16x142xf32>
    %cst_14 = arith.constant 5.000000e-01 : f32
    %88 = vector.broadcast %cst_14 : f32 to vector<16x142xf32>
    %89 = arith.mulf %87, %88 : vector<16x142xf32>
    %cst_15 = arith.constant 0.000000e+00 : f32
    %cst_16 = arith.constant 1.000000e+00 : f32
    %90 = vector.broadcast %cst_15 : f32 to vector<16x142xf32>
    %91 = arith.maximumf %90, %89 : vector<16x142xf32>
    %92 = vector.broadcast %cst_16 : f32 to vector<16x142xf32>
    %93 = arith.minimumf %92, %91 : vector<16x142xf32>
    %c0_17 = arith.constant 0 : index
    %c0_18 = arith.constant 0 : index
    %c0_19 = arith.constant 0 : index
    %94 = vector.load %arg3[%c0_17, %c0_18, %c0_19] : memref<1x16x142xf32, #tpu.memory_space<vmem>>, vector<1x16x142xf32>
    %95 = vector.shape_cast %94 : vector<1x16x142xf32> to vector<16x142xf32>
    %96 = vector.shape_cast %93 : vector<16x142xf32> to vector<1x16x142xf32>
    tpu.vector_store %arg3[%c0_17, %c0_18, %c0_19], %96 {strides = array<i32>} : memref<1x16x142xf32, #tpu.memory_space<vmem>>, vector<1x16x142xf32>,
    return
  }
  func.func @transform_0(%arg0: i32) -> (i32, i32, i32) {
    %c0_i32 = arith.constant 0 : i32
    %c0_i32_0 = arith.constant 0 : i32
    %c0_i32_1 = arith.constant 0 : i32
    return %arg0, %c0_i32, %c0_i32_0 : i32, i32, i32
  }
  func.func @transform_1(%arg0: i32) -> (i32, i32, i32) {
    %c0_i32 = arith.constant 0 : i32
    %c0_i32_0 = arith.constant 0 : i32
    %c0_i32_1 = arith.constant 0 : i32
    return %arg0, %c0_i32, %c0_i32_0 : i32, i32, i32
  }
  func.func @transform_2(%arg0: i32) -> (i32, i32, i32) {
    %c0_i32 = arith.constant 0 : i32
    %c0_i32_0 = arith.constant 0 : i32
    %c0_i32_1 = arith.constant 0 : i32
    return %arg0, %c0_i32, %c0_i32_0 : i32, i32, i32
  }
}

</mosaic_0001>

<llo_original>
// kernel: ssim.1
$region0: #{ssim.1}
  #allocation0 [shape = 'u32[]', space=smem, size = 0x4, offset = 0x4, fixed_abs, tag = 'smem constant byte address 0x4 - core index']
  #allocation1 [shape = 'u32[72,128]{1,0:T(1,128)}', space=vmem, size = 0x9000, scoped, tag = 'internal scratch']
  %s0 = inlined_call_operand.vmem [shape: f32[1,18,144], index: 0, kind: input, shape index: {}]
  %s1 = inlined_call_operand.vmem [shape: f32[1,18,144], index: 1, kind: input, shape index: {}]
  %s2 = inlined_call_operand.vmem [shape: f32[1,16,142], index: 2, kind: output, shape index: {}]
  %s3 = sld [smem:[#allocation0]]
  $region18: #{ssim.1} parent=0
    _
  %s5 = ssub.s32 1, %s3
  %s6 = scalar_select 0, %s5, %s3
  // Predicated region
  $region2: #{ssim.1} parent=0 // pred_check
    _
  $region3: #{ssim.1} parent=0 // pred_check_branch
    %8 = sbr.rel (0) target = $region5
  $region4: #{ssim.1} parent=0 // pred_region
    _
  $region5: #{ssim.1} parent=0 // pred_fallthru
    _
  // Predicated region
  $region6: #{ssim.1} parent=0 // pred_check
    _
  $region7: #{ssim.1} parent=0 // pred_check_branch
    %10 = sbr.rel (0) target = $region9
  $region8: #{ssim.1} parent=0 // pred_region
    _
  $region9: #{ssim.1} parent=0 // pred_fallthru
    _
  %v11 = vld [vmem:[%s0] sm:$0xff]
  %v12 = vld [vmem:[%s0 + $0x8] sm:$0xff]
  %v13 = vld [vmem:[%s0 + $0x10] sm:$0xff]
  %v14 = vld [vmem:[%s0 + $0x18] sm:$0xff]
  %v15 = vld [vmem:[%s0 + $0x20] sm:$0x3]
  %v16 = vld [vmem:[%s0 + $0x28] sm:$0x3]
  %v17 = vld [vmem:[%s1] sm:$0xff]
  %v18 = vld [vmem:[%s1 + $0x8] sm:$0xff]
  %v19 = vld [vmem:[%s1 + $0x10] sm:$0xff]
  %v20 = vld [vmem:[%s1 + $0x18] sm:$0xff]
  %v21 = vld [vmem:[%s1 + $0x20] sm:$0x3]
  %v22 = vld [vmem:[%s1 + $0x28] sm:$0x3]
  %vm29 = vcmask 1046528
  %v30 = vrot.slane %v11, 1
  %v31 = vrot.slane %v13, 1
  %v32 = vsel %vm29, %v30, %v31
  %v33 = vrot.slane %v12, 1
  %v34 = vrot.slane %v14, 1
  %v35 = vsel %vm29, %v33, %v34
  %v36 = vrot.slane %v15, 1
  %v37 = vsel %vm29, %v31, %v36
  %v38 = vrot.slane %v16, 1
  %v39 = vsel %vm29, %v34, %v38
  %v44 = vadd.f32 %v11, %v32
  %v45 = vadd.f32 %v12, %v35
  %v46 = vadd.f32 %v13, %v37
  %v47 = vadd.f32 %v14, %v39
  %vm48 = vcmask 1045504
  %v49 = vrot.slane %v11, 2
  %v50 = vrot.slane %v13, 2
  %v51 = vsel %vm48, %v49, %v50
  %v52 = vrot.slane %v12, 2
  %v53 = vrot.slane %v14, 2
  %v54 = vsel %vm48, %v52, %v53
  %v55 = vrot.slane %v15, 2
  %v56 = vsel %vm48, %v50, %v55
  %v57 = vrot.slane %v16, 2
  %v58 = vsel %vm48, %v53, %v57
  %v63 = vadd.f32 %v44, %v51
  %v64 = vadd.f32 %v45, %v54
  %v65 = vadd.f32 %v46, %v56
  %v66 = vadd.f32 %v47, %v58
  %v73 = vrot.slane %v17, 1
  %v74 = vrot.slane %v19, 1
  %v75 = vsel %vm29, %v73, %v74
  %v76 = vrot.slane %v18, 1
  %v77 = vrot.slane %v20, 1
  %v78 = vsel %vm29, %v76, %v77
  %v79 = vrot.slane %v21, 1
  %v80 = vsel %vm29, %v74, %v79
  %v81 = vrot.slane %v22, 1
  %v82 = vsel %vm29, %v77, %v81
  %v87 = vadd.f32 %v17, %v75
  %v88 = vadd.f32 %v18, %v78
  %v89 = vadd.f32 %v19, %v80
  %v90 = vadd.f32 %v20, %v82
  %v91 = vrot.slane %v17, 2
  %v92 = vrot.slane %v19, 2
  %v93 = vsel %vm48, %v91, %v92
  %v94 = vrot.slane %v18, 2
  %v95 = vrot.slane %v20, 2
  %v96 = vsel %vm48, %v94, %v95
  %v97 = vrot.slane %v21, 2
  %v98 = vsel %vm48, %v92, %v97
  %v99 = vrot.slane %v22, 2
  %v100 = vsel %vm48, %v95, %v99
  %v105 = vadd.f32 %v87, %v93
  %v106 = vadd.f32 %v88, %v96
  %v107 = vadd.f32 %v89, %v98
  %v108 = vadd.f32 %v90, %v100
  %v109 = vmul.f32 %v11, %v11
  %v110 = vmul.f32 %v12, %v12
  %v111 = vmul.f32 %v13, %v13
  %v112 = vmul.f32 %v14, %v14
  %v113 = vmul.f32 %v15, %v15
  %v114 = vmul.f32 %v16, %v16
  %v121 = vrot.slane %v109, 1
  %v122 = vrot.slane %v111, 1
  %v123 = vsel %vm29, %v121, %v122
  %v124 = vrot.slane %v110, 1
  %v125 = vrot.slane %v112, 1
  %v126 = vsel %vm29, %v124, %v125
  %v127 = vrot.slane %v113, 1
  %v128 = vsel %vm29, %v122, %v127
  %v129 = vrot.slane %v114, 1
  %v130 = vsel %vm29, %v125, %v129
  %v135 = vadd.f32 %v109, %v123
  %v136 = vadd.f32 %v110, %v126
  %v137 = vadd.f32 %v111, %v128
  %v138 = vadd.f32 %v112, %v130
  %v139 = vrot.slane %v109, 2
  %v140 = vrot.slane %v111, 2
  %v141 = vsel %vm48, %v139, %v140
  %v142 = vrot.slane %v110, 2
  %v143 = vrot.slane %v112, 2
  %v144 = vsel %vm48, %v142, %v143
  %v145 = vrot.slane %v113, 2
  %v146 = vsel %vm48, %v140, %v145
  %v147 = vrot.slane %v114, 2
  %v148 = vsel %vm48, %v143, %v147
  %v153 = vadd.f32 %v135, %v141
  %v154 = vadd.f32 %v136, %v144
  %v155 = vadd.f32 %v137, %v146
  %v156 = vadd.f32 %v138, %v148
  %v157 = vmul.f32 %v17, %v17
  %v158 = vmul.f32 %v18, %v18
  %v159 = vmul.f32 %v19, %v19
  %v160 = vmul.f32 %v20, %v20
  %v161 = vmul.f32 %v21, %v21
  %v162 = vmul.f32 %v22, %v22
  %v169 = vrot.slane %v157, 1
  %v170 = vrot.slane %v159, 1
  %v171 = vsel %vm29, %v169, %v170
  %v172 = vrot.slane %v158, 1
  %v173 = vrot.slane %v160, 1
  %v174 = vsel %vm29, %v172, %v173
  %v175 = vrot.slane %v161, 1
  %v176 = vsel %vm29, %v170, %v175
  %v177 = vrot.slane %v162, 1
  %v178 = vsel %vm29, %v173, %v177
  %v183 = vadd.f32 %v157, %v171
  %v184 = vadd.f32 %v158, %v174
  %v185 = vadd.f32 %v159, %v176
  %v186 = vadd.f32 %v160, %v178
  %v187 = vrot.slane %v157, 2
  %v188 = vrot.slane %v159, 2
  %v189 = vsel %vm48, %v187, %v188
  %v190 = vrot.slane %v158, 2
  %v191 = vrot.slane %v160, 2
  %v192 = vsel %vm48, %v190, %v191
  %v193 = vrot.slane %v161, 2
  %v194 = vsel %vm48, %v188, %v193
  %v195 = vrot.slane %v162, 2
  %v196 = vsel %vm48, %v191, %v195
  %v201 = vadd.f32 %v183, %v189
  %v202 = vadd.f32 %v184, %v192
  %v203 = vadd.f32 %v185, %v194
  %v204 = vadd.f32 %v186, %v196
  %v205 = vmul.f32 %v11, %v17
  %v206 = vmul.f32 %v12, %v18
  %v207 = vmul.f32 %v13, %v19
  %v208 = vmul.f32 %v14, %v20
  %v209 = vmul.f32 %v15, %v21
  %v210 = vmul.f32 %v16, %v22
  %v217 = vrot.slane %v205, 1
  %v218 = vrot.slane %v207, 1
  %v219 = vsel %vm29, %v217, %v218
  %v220 = vrot.slane %v206, 1
  %v221 = vrot.slane %v208, 1
  %v222 = vsel %vm29, %v220, %v221
  %v223 = vrot.slane %v209, 1
  %v224 = vsel %vm29, %v218, %v223
  %v225 = vrot.slane %v210, 1
  %v226 = vsel %vm29, %v221, %v225
  %v231 = vadd.f32 %v205, %v219
  %v232 = vadd.f32 %v206, %v222
  %v233 = vadd.f32 %v207, %v224
  %v234 = vadd.f32 %v208, %v226
  %v235 = vrot.slane %v205, 2
  %v236 = vrot.slane %v207, 2
  %v237 = vsel %vm48, %v235, %v236
  %v238 = vrot.slane %v206, 2
  %v239 = vrot.slane %v208, 2
  %v240 = vsel %vm48, %v238, %v239
  %v241 = vrot.slane %v209, 2
  %v242 = vsel %vm48, %v236, %v241
  %v243 = vrot.slane %v210, 2
  %v244 = vsel %vm48, %v239, %v243
  %v249 = vadd.f32 %v231, %v237
  %v250 = vadd.f32 %v232, %v240
  %v251 = vadd.f32 %v233, %v242
  %v252 = vadd.f32 %v234, %v244
  %257 = vrot.lane.b32.xlu0 %v63, 127
  %v258 = vpop.permute.xlu0 %257
  %259 = vrot.lane.b32.xlu0 %v64, 127
  %v260 = vpop.permute.xlu0 %259
  %261 = vrot.lane.b32.xlu0 %v65, 127
  %v262 = vpop.permute.xlu0 %261
  %263 = vrot.lane.b32.xlu0 %v66, 127
  %v264 = vpop.permute.xlu0 %263
  %vm265 = vcmask 1039360
  %v266 = vsel %vm265, %v258, %v260
  %v267 = vsel %vm265, %v262, %v264
  %v272 = vadd.f32 %v63, %v266
  %v273 = vadd.f32 %v64, %v260
  %v274 = vadd.f32 %v65, %v267
  %v275 = vadd.f32 %v66, %v264
  %276 = vrot.lane.b32.xlu0 %v63, 126
  %v277 = vpop.permute.xlu0 %276
  %278 = vrot.lane.b32.xlu0 %v64, 126
  %v279 = vpop.permute.xlu0 %278
  %280 = vrot.lane.b32.xlu0 %v65, 126
  %v281 = vpop.permute.xlu0 %280
  %282 = vrot.lane.b32.xlu0 %v66, 126
  %v283 = vpop.permute.xlu0 %282
  %vm284 = vcmask 1031168
  %v285 = vsel %vm284, %v277, %v279
  %v286 = vsel %vm284, %v281, %v283
  %v291 = vadd.f32 %v272, %v285
  %v292 = vadd.f32 %v273, %v279
  %v293 = vadd.f32 %v274, %v286
  %v294 = vadd.f32 %v275, %v283
  %299 = vrot.lane.b32.xlu0 %v105, 127
  %v300 = vpop.permute.xlu0 %299
  %301 = vrot.lane.b32.xlu0 %v106, 127
  %v302 = vpop.permute.xlu0 %301
  %303 = vrot.lane.b32.xlu0 %v107, 127
  %v304 = vpop.permute.xlu0 %303
  %305 = vrot.lane.b32.xlu0 %v108, 127
  %v306 = vpop.permute.xlu0 %305
  %v307 = vsel %vm265, %v300, %v302
  %v308 = vsel %vm265, %v304, %v306
  %v313 = vadd.f32 %v105, %v307
  %v314 = vadd.f32 %v106, %v302
  %v315 = vadd.f32 %v107, %v308
  %v316 = vadd.f32 %v108, %v306
  %317 = vrot.lane.b32.xlu0 %v105, 126
  %v318 = vpop.permute.xlu0 %317
  %319 = vrot.lane.b32.xlu0 %v106, 126
  %v320 = vpop.permute.xlu0 %319
  %321 = vrot.lane.b32.xlu0 %v107, 126
  %v322 = vpop.permute.xlu0 %321
  %323 = vrot.lane.b32.xlu0 %v108, 126
  %v324 = vpop.permute.xlu0 %323
  %v325 = vsel %vm284, %v318, %v320
  %v326 = vsel %vm284, %v322, %v324
  %v331 = vadd.f32 %v313, %v325
  %v332 = vadd.f32 %v314, %v320
  %v333 = vadd.f32 %v315, %v326
  %v334 = vadd.f32 %v316, %v324
  %339 = vrot.lane.b32.xlu0 %v153, 127
  %v340 = vpop.permute.xlu0 %339
  %341 = vrot.lane.b32.xlu0 %v154, 127
  %v342 = vpop.permute.xlu0 %341
  %343 = vrot.lane.b32.xlu0 %v155, 127
  %v344 = vpop.permute.xlu0 %343
  %345 = vrot.lane.b32.xlu0 %v156, 127
  %v346 = vpop.permute.xlu0 %345
  %v347 = vsel %vm265, %v340, %v342
  %v348 = vsel %vm265, %v344, %v346
  %v353 = vadd.f32 %v153, %v347
  %v354 = vadd.f32 %v154, %v342
  %v355 = vadd.f32 %v155, %v348
  %v356 = vadd.f32 %v156, %v346
  %357 = vrot.lane.b32.xlu0 %v153, 126
  %v358 = vpop.permute.xlu0 %357
  %359 = vrot.lane.b32.xlu0 %v154, 126
  %v360 = vpop.permute.xlu0 %359
  %361 = vrot.lane.b32.xlu0 %v155, 126
  %v362 = vpop.permute.xlu0 %361
  %363 = vrot.lane.b32.xlu0 %v156, 126
  %v364 = vpop.permute.xlu0 %363
  %v365 = vsel %vm284, %v358, %v360
  %v366 = vsel %vm284, %v362, %v364
  %v371 = vadd.f32 %v353, %v365
  %v372 = vadd.f32 %v354, %v360
  %v373 = vadd.f32 %v355, %v366
  %v374 = vadd.f32 %v356, %v364
  %379 = vrot.lane.b32.xlu0 %v201, 127
  %v380 = vpop.permute.xlu0 %379
  %381 = vrot.lane.b32.xlu0 %v202, 127
  %v382 = vpop.permute.xlu0 %381
  %383 = vrot.lane.b32.xlu0 %v203, 127
  %v384 = vpop.permute.xlu0 %383
  %385 = vrot.lane.b32.xlu0 %v204, 127
  %v386 = vpop.permute.xlu0 %385
  %v387 = vsel %vm265, %v380, %v382
  %v388 = vsel %vm265, %v384, %v386
  %v393 = vadd.f32 %v201, %v387
  %v394 = vadd.f32 %v202, %v382
  %v395 = vadd.f32 %v203, %v388
  %v396 = vadd.f32 %v204, %v386
  %397 = vrot.lane.b32.xlu0 %v201, 126
  %v398 = vpop.permute.xlu0 %397
  %399 = vrot.lane.b32.xlu0 %v202, 126
  %v400 = vpop.permute.xlu0 %399
  %401 = vrot.lane.b32.xlu0 %v203, 126
  %v402 = vpop.permute.xlu0 %401
  %403 = vrot.lane.b32.xlu0 %v204, 126
  %v404 = vpop.permute.xlu0 %403
  %v405 = vsel %vm284, %v398, %v400
  %v406 = vsel %vm284, %v402, %v404
  %v411 = vadd.f32 %v393, %v405
  %v412 = vadd.f32 %v394, %v400
  %v413 = vadd.f32 %v395, %v406
  %v414 = vadd.f32 %v396, %v404
  %419 = vrot.lane.b32.xlu0 %v249, 127
  %v420 = vpop.permute.xlu0 %419
  %421 = vrot.lane.b32.xlu0 %v250, 127
  %v422 = vpop.permute.xlu0 %421
  %423 = vrot.lane.b32.xlu0 %v251, 127
  %v424 = vpop.permute.xlu0 %423
  %425 = vrot.lane.b32.xlu0 %v252, 127
  %v426 = vpop.permute.xlu0 %425
  %v427 = vsel %vm265, %v420, %v422
  %v428 = vsel %vm265, %v424, %v426
  %v433 = vadd.f32 %v249, %v427
  %v434 = vadd.f32 %v250, %v422
  %v435 = vadd.f32 %v251, %v428
  %v436 = vadd.f32 %v252, %v426
  %437 = vrot.lane.b32.xlu0 %v249, 126
  %v438 = vpop.permute.xlu0 %437
  %439 = vrot.lane.b32.xlu0 %v250, 126
  %v440 = vpop.permute.xlu0 %439
  %441 = vrot.lane.b32.xlu0 %v251, 126
  %v442 = vpop.permute.xlu0 %441
  %443 = vrot.lane.b32.xlu0 %v252, 126
  %v444 = vpop.permute.xlu0 %443
  %v445 = vsel %vm284, %v438, %v440
  %v446 = vsel %vm284, %v442, %v444
  %v451 = vadd.f32 %v433, %v445
  %v452 = vadd.f32 %v434, %v440
  %v453 = vadd.f32 %v435, %v446
  %v454 = vadd.f32 %v436, %v444
  %v455 = vmul.f32 %v291, %v331
  %v456 = vmul.f32 %v292, %v332
  %v457 = vmul.f32 %v293, %v333
  %v458 = vmul.f32 %v294, %v334
  %v459 = vmul.f32 %v291, %v291
  %v460 = vmul.f32 %v292, %v292
  %v461 = vmul.f32 %v293, %v293
  %v462 = vmul.f32 %v294, %v294
  %v463 = vmul.f32 %v331, %v331
  %v464 = vmul.f32 %v332, %v332
  %v465 = vmul.f32 %v333, %v333
  %v466 = vmul.f32 %v334, %v334
  %v467 = vmul.f32 %v455, 2.0
  %v468 = vmul.f32 %v456, 2.0
  %v469 = vmul.f32 %v457, 2.0
  %v470 = vmul.f32 %v458, 2.0
  %v471 = vadd.f32 %v467, 0.0081
  %v472 = vadd.f32 %v468, 0.0081
  %v473 = vadd.f32 %v469, 0.0081
  %v474 = vadd.f32 %v470, 0.0081
  %v475 = vmul.f32 %v451, 9.0
  %v476 = vmul.f32 %v452, 9.0
  %v477 = vmul.f32 %v453, 9.0
  %v478 = vmul.f32 %v454, 9.0
  %v479 = vsub.f32 %v475, %v455
  %v480 = vsub.f32 %v476, %v456
  %v481 = vsub.f32 %v477, %v457
  %v482 = vsub.f32 %v478, %v458
  %v483 = vmul.f32 %v479, 2.0
  %v484 = vmul.f32 %v480, 2.0
  %v485 = vmul.f32 %v481, 2.0
  %v486 = vmul.f32 %v482, 2.0
  %v487 = vadd.f32 %v483, 0.0729
  %v488 = vadd.f32 %v484, 0.0729
  %v489 = vadd.f32 %v485, 0.0729
  %v490 = vadd.f32 %v486, 0.0729
  %v491 = vmul.f32 %v471, %v487
  %v492 = vmul.f32 %v472, %v488
  %v493 = vmul.f32 %v473, %v489
  %v494 = vmul.f32 %v474, %v490
  %v495 = vadd.f32 %v459, %v463
  %v496 = vadd.f32 %v460, %v464
  %v497 = vadd.f32 %v461, %v465
  %v498 = vadd.f32 %v462, %v466
  %v499 = vadd.f32 %v495, 0.0081
  %v500 = vadd.f32 %v496, 0.0081
  %v501 = vadd.f32 %v497, 0.0081
  %v502 = vadd.f32 %v498, 0.0081
  %v503 = vadd.f32 %v371, %v411
  %v504 = vadd.f32 %v372, %v412
  %v505 = vadd.f32 %v373, %v413
  %v506 = vadd.f32 %v374, %v414
  %v507 = vmul.f32 %v503, 9.0
  %v508 = vmul.f32 %v504, 9.0
  %v509 = vmul.f32 %v505, 9.0
  %v510 = vmul.f32 %v506, 9.0
  %v511 = vsub.f32 %v507, %v459
  %v512 = vsub.f32 %v508, %v460
  %v513 = vsub.f32 %v509, %v461
  %v514 = vsub.f32 %v510, %v462
  %v515 = vsub.f32 %v511, %v463
  %v516 = vsub.f32 %v512, %v464
  %v517 = vsub.f32 %v513, %v465
  %v518 = vsub.f32 %v514, %v466
  %v519 = vadd.f32 %v515, 0.0729
  %v520 = vadd.f32 %v516, 0.0729
  %v521 = vadd.f32 %v517, 0.0729
  %v522 = vadd.f32 %v518, 0.0729
  %v523 = vmul.f32 %v499, %v519
  %v524 = vmul.f32 %v500, %v520
  %v525 = vmul.f32 %v501, %v521
  %v526 = vmul.f32 %v502, %v522
  %v527 = vrcp.pop %v523
  %v528 = vrcp.pop %v524
  %v529 = vrcp.pop %v525
  %v530 = vrcp.pop %v526
  %v531 = vmul.f32 %v523, %v527
  %v532 = vmul.f32 %v524, %v528
  %v533 = vmul.f32 %v525, %v529
  %v534 = vmul.f32 %v526, %v530
  %v535 = vsub.f32 2.0, %v531
  %v536 = vsub.f32 2.0, %v532
  %v537 = vsub.f32 2.0, %v533
  %v538 = vsub.f32 2.0, %v534
  %v539 = vmul.f32 %v527, %v535
  %v540 = vmul.f32 %v528, %v536
  %v541 = vmul.f32 %v529, %v537
  %v542 = vmul.f32 %v530, %v538
  %v543 = vmul.f32 %v491, %v539
  %v544 = vmul.f32 %v492, %v540
  %v545 = vmul.f32 %v493, %v541
  %v546 = vmul.f32 %v494, %v542
  %v547 = vsub.f32 1.0, %v543
  %v548 = vsub.f32 1.0, %v544
  %v549 = vsub.f32 1.0, %v545
  %v550 = vsub.f32 1.0, %v546
  %v551 = vmul.f32 %v547, 0.5
  %v552 = vmul.f32 %v548, 0.5
  %v553 = vmul.f32 %v549, 0.5
  %v554 = vmul.f32 %v550, 0.5
  %v555 = vmax.f32 %v551, 0.0
  %v556 = vmax.f32 %v552, 0.0
  %v557 = vmax.f32 %v553, 0.0
  %v558 = vmax.f32 %v554, 0.0
  %v559 = vmin.f32 %v555, 1.0
  %v560 = vmin.f32 %v556, 1.0
  %v561 = vmin.f32 %v557, 1.0
  %v562 = vmin.f32 %v558, 1.0
  %563 = vst [vmem:[%s2] sm:$0xff] %v559
  %vm564 = vcmask 113664
  %565 = vst.msk [vmem:[%s2 + $0x8] sm:$0xff] %vm564, %v560
  %566 = vst [vmem:[%s2 + $0x10] sm:$0xff] %v561
  %567 = vst.msk [vmem:[%s2 + $0x18] sm:$0xff] %vm564, %v562
  // Predicated region
  $region10: #{ssim.1} parent=0 // pred_check
    _
  $region11: #{ssim.1} parent=0 // pred_check_branch
    %569 = sbr.rel (0) target = $region13
  $region12: #{ssim.1} parent=0 // pred_region
    _
  $region13: #{ssim.1} parent=0 // pred_fallthru
    _
  // Predicated region
  $region14: #{ssim.1} parent=0 // pred_check
    _
  $region15: #{ssim.1} parent=0 // pred_check_branch
    %571 = sbr.rel (0) target = $region17
  $region16: #{ssim.1} parent=0 // pred_region
    _
  $region17: #{ssim.1} parent=0 // pred_fallthru
    _

</llo_original>
